<compile_context>
chip_gen: v7x
topology: tpu7x:2x2x1
jax: 0.10.0
libtpu: 0.0.40
codegen_flags: <defaults>
</compile_context>

<pallas_src>
import functools
import math
from typing import NamedTuple

import jax
import jax.numpy as jnp
from jax import lax
from jax.experimental import pallas as pl
from jax.experimental.pallas import tpu as pltpu


# --------------------------------------------------------------------------- kernel
def ieblock_kernel(x_ref, w1_ref, b1_ref, w2_ref, b2_ref, wo_ref, wbd_ref,
                   obias_ref, aw_ref, ab_ref, inv_aw_ref, o_ref):
    x = x_ref[0]                                         # (L, BN) f32

    # ---- instance normalization over input_dim (L), per packed (batch,node) lane ----
    means = jnp.mean(x, axis=0, keepdims=True)           # (1, BN)
    xc = x - means
    var = jnp.mean(xc * xc, axis=0, keepdims=True)       # unbiased=False
    inv_std = lax.rsqrt(var + 1e-5)                      # EUP rsqrt, no divide
    stdev = (var + 1e-5) * inv_std                       # == sqrt(var+eps), no 2nd sqrt
    xn = xc * (inv_std * aw_ref[...]) + ab_ref[...]      # (L, BN) f32

    # Matmul operands use the weight dtype (bf16 on the fast path); accumulation
    # and every elementwise op stay in f32.
    w1 = w1_ref[...]
    mm = w1.dtype

    # ---- spatial_proj: Linear(L->H) + LeakyReLU(0.01) + Linear(H->F), columns = samples ----
    h = jnp.dot(w1, xn.astype(mm), preferred_element_type=jnp.float32) + b1_ref[...]   # (H, BN)
    h = jnp.maximum(h, 0.01 * h)                                                       # LeakyReLU
    f = jnp.dot(w2_ref[...], h.astype(mm), preferred_element_type=jnp.float32) + b2_ref[...]  # (F, BN)

    # ---- output_proj pulled ahead of the BN x BN block-diag channel matmul ----
    # Wo @ (f @ Wbd + bc) + bo == (Wo @ f) @ Wbd + rowsum(Wo) (x) bc + bo  (obias folded on host)
    g = jnp.dot(wo_ref[...], f.astype(mm), preferred_element_type=jnp.float32)         # (O, BN)
    out = (jnp.dot(g.astype(mm), wbd_ref[...], preferred_element_type=jnp.float32)
           + obias_ref[...])                                                           # (O, BN)

    # ---- de-normalize (host-precomputed 1/aw, no in-kernel divide) ----
    o_ref[0] = ((out - ab_ref[...]) * inv_aw_ref[...] * stdev + means).astype(o_ref.dtype)


# --------------------------------------------------------------------------- planning
class IECfg(NamedTuple):
    B: int
    L: int
    N: int
    H: int
    F: int
    O: int
    b_blk: int
    G: int
    B_pad: int
    BN: int


def _tensorcores_per_chip() -> int:
    """Best-effort TensorCore count per chip (v7x has 2). Never raises; defaults to 1."""
    try:
        info = pltpu.get_tpu_info()
        for name in ("tensorcores_per_chip", "num_tensorcores", "num_cores", "cores_per_chip"):
            v = getattr(info, name, None)
            if isinstance(v, int) and v > 0:
                return v
    except Exception:
        pass
    try:
        v = getattr(jax.devices()[0], "num_cores", None)
        if isinstance(v, int) and v > 0:
            return v
    except Exception:
        pass
    return 1


def plan_ieblock(B, L, N, H, F, O, *, lane_target=512, max_bn=1024):
    """Pick batches-per-block so BN = b_blk*N is a multiple of 128 (lane-dense
    stores, full vregs) and close to lane_target, without blowing the VMEM
    budget for the resident (BN, BN) channel weight."""
    b_unit = 128 // math.gcd(N, 128)        # smallest b_blk with b_blk*N % 128 == 0
    if b_unit * N > max_bn:                 # very large N: give up on 128-alignment;
        b_unit = 1                          # relative lane waste is already small
    units_for_B = max(1, -(-B // b_unit))   # ceil(B / b_unit)
    mult = max(1, lane_target // max(1, b_unit * N))
    mult = min(mult, units_for_B)           # never wider than needed to cover B
    b_blk = b_unit * mult
    if b_blk * N > max_bn:                  # keep the (BN,BN) block-diag weight in budget
        b_blk = max(b_unit, ((max_bn // N) // max(1, b_unit)) * b_unit)
    G = -(-B // b_blk)
    # v7x (2 TensorCores): split into 2 "parallel" grid steps only when each step
    # stays >=128 lanes dense.  Single-TC chips (v5e/v6e) never trade lane density
    # for extra grid steps.
    if _tensorcores_per_chip() >= 2 and G == 1 and units_for_B >= 2:
        b_blk = b_unit * (-(-units_for_B // 2))
        G = -(-B // b_blk)
    B_pad = G * b_blk
    return IECfg(B, L, N, H, F, O, b_blk, G, B_pad, b_blk * N)


# --------------------------------------------------------------------------- host prep
def prepare_ieblock(params, cfg, *, matmul_dtype=jnp.bfloat16):
    """x-independent preparation.  Depends only on (params, cfg.b_blk, matmul_dtype):
    build ONCE and reuse across forward calls (and across batch sizes sharing b_blk)."""
    N, H, F, O, b_blk, BN = cfg.N, cfg.H, cfg.F, cfg.O, cfg.b_blk, cfg.BN
    w1, b1 = params["w1"], params["b1"]     # (H, L), (H,)
    w2, b2 = params["w2"], params["b2"]     # (F, H), (F,)
    wc, bc = params["wc"], params["bc"]     # (N, N), (N,)
    wo, bo = params["wo"], params["bo"]     # (O, F), (O,)
    aw, ab = params["aw"], params["ab"]     # (N,),   (N,)

    mm = matmul_dtype
    wcI = wc.T + jnp.eye(N, dtype=wc.dtype)                    # residual folded into weight
    w_bd = jnp.kron(jnp.eye(b_blk, dtype=wc.dtype), wcI)       # (BN, BN) block-diagonal
    bc_row = jnp.tile(bc, b_blk)[None, :]                      # (1, BN)
    aw_row = jnp.tile(aw, b_blk)[None, :]
    ab_row = jnp.tile(ab, b_blk)[None, :]

    prep = {
        "w1": w1.astype(mm),
        "b1": jnp.tile(b1[:, None], (1, BN)).astype(jnp.float32),   # lane-wide, no in-kernel splat
        "w2": w2.astype(mm),
        "b2": jnp.tile(b2[:, None], (1, BN)).astype(jnp.float32),
        "wo": wo.astype(mm),
        "w_bd": w_bd.astype(mm),
        # out = (Wo @ f) @ Wbd + rowsum(Wo) (x) bc + bo   (biases folded here, f32)
        "obias": (jnp.sum(wo, axis=1, keepdims=True) * bc_row + bo[:, None]).astype(jnp.float32),
        "aw": aw_row.astype(jnp.float32),
        "ab": ab_row.astype(jnp.float32),
        "inv_aw": (1.0 / aw_row).astype(jnp.float32),
    }
    return jax.device_put(prep)


# --------------------------------------------------------------------------- forward
@functools.partial(jax.jit, static_argnums=(2,))
def _ieblock_apply(x, prep, cfg):
    B, L, N, H, F, O = cfg.B, cfg.L, cfg.N, cfg.H, cfg.F, cfg.O
    b_blk, G, B_pad, BN = cfg.b_blk, cfg.G, cfg.B_pad, cfg.BN

    # TODO(synk): this pack/unpack is a full extra HBM pass over x/out; keep callers
    # in the packed (G, L, BN) layout across stacked IEBlocks to amortize it.
    x_p = x if B_pad == B else jnp.pad(x, ((0, B_pad - B), (0, 0), (0, 0)))
    x_g = x_p.reshape(G, b_blk, L, N).transpose(0, 2, 1, 3).reshape(G, L, BN)

    def full_spec(shape):
        zeros = (0,) * len(shape)
        return pl.BlockSpec(shape, lambda g: zeros)

    weights = (prep["w1"], prep["b1"], prep["w2"], prep["b2"], prep["wo"],
               prep["w_bd"], prep["obias"], prep["aw"], prep["ab"], prep["inv_aw"])
    weight_bytes = sum(int(v.size) * v.dtype.itemsize for v in weights)
    cost = pl.CostEstimate(
        flops=int(2 * G * BN * (H * L + F * H + O * F + O * BN) + 12 * G * L * BN),
        transcendentals=int(G * BN),
        bytes_accessed=int(4 * G * BN * (L + O) + weight_bytes),
    )

    out_g = pl.pallas_call(
        ieblock_kernel,
        out_shape=jax.ShapeDtypeStruct((G, O, BN), x.dtype),
        grid_spec=pltpu.PrefetchScalarGridSpec(
            num_scalar_prefetch=0,
            grid=(G,),
            in_specs=[
                pl.BlockSpec((1, L, BN), lambda g: (g, 0, 0)),  # x slab (lane-dense)
                full_spec((H, L)),      # W1
                full_spec((H, BN)),     # b1 (lane-tiled)
                full_spec((F, H)),      # W2
                full_spec((F, BN)),     # b2 (lane-tiled)
                full_spec((O, F)),      # Wo
                full_spec((BN, BN)),    # blockdiag(Wc^T + I)
                full_spec((O, BN)),     # folded output bias
                full_spec((1, BN)),     # affine_weight (tiled)
                full_spec((1, BN)),     # affine_bias (tiled)
                full_spec((1, BN)),     # 1 / affine_weight (tiled)
            ],
            out_specs=pl.BlockSpec((1, O, BN), lambda g: (g, 0, 0)),
        ),
        compiler_params=pltpu.CompilerParams(dimension_semantics=("parallel",)),
        cost_estimate=cost,
    )(x_g, *weights)

    # un-pack: (G, O, b_blk*N) -> (B_pad, O, N) -> drop padded batches
    out = out_g.reshape(G, O, b_blk, N).transpose(0, 2, 1, 3).reshape(B_pad, O, N)
    return out[:B]


def ieblock_forward(x, prep, cfg):
    assert x.shape == (cfg.B, cfg.L, cfg.N)
    return _ieblock_apply(x, prep, cfg)


# --------------------------------------------------------------------------- reference
def ieblock_reference(x, params):
    """Pure-JAX replica of the PyTorch forward (for verification)."""
    w1, b1 = params["w1"], params["b1"]
    w2, b2 = params["w2"], params["b2"]
    wc, bc = params["wc"], params["bc"]
    wo, bo = params["wo"], params["bo"]
    aw, ab = params["aw"].reshape(1, 1, -1), params["ab"].reshape(1, 1, -1)

    means = jnp.mean(x, axis=1, keepdims=True)
    xc = x - means
    stdev = jnp.sqrt(jnp.var(xc, axis=1, keepdims=True) + 1e-5)
    xn = xc / stdev * aw + ab

    u = jnp.transpose(xn, (0, 2, 1))                   # (B, N, L)
    v1 = u @ w1.T + b1
    v1 = jnp.where(v1 > 0, v1, 0.01 * v1)              # LeakyReLU
    y = v1 @ w2.T + b2                                 # (B, N, F)
    yT = jnp.transpose(y, (0, 2, 1))                   # (B, F, N)
    z = yT + (yT @ wc.T + bc)                          # (B, F, N)
    zT = jnp.transpose(z, (0, 2, 1))                   # (B, N, F)
    o = zT @ wo.T + bo                                 # (B, N, O)
    o = jnp.transpose(o, (0, 2, 1))                    # (B, O, N)
    o = (o - ab) / aw
    o = o * stdev + means
    return o


def init_params(key, input_dim, hid_dim, f1_size, output_dim, num_node):
    ks = jax.random.split(key, 9)
    return {
        "w1": 0.1 * jax.random.normal(ks[0], (hid_dim, input_dim), jnp.float32),
        "b1": 0.1 * jax.random.normal(ks[1], (hid_dim,), jnp.float32),
        "w2": 0.1 * jax.random.normal(ks[2], (f1_size, hid_dim), jnp.float32),
        "b2": 0.1 * jax.random.normal(ks[3], (f1_size,), jnp.float32),
        # channel_proj: eye_ init in the module; perturb slightly so the channel
        # mixing path is exercised non-trivially (semantics hold for any weight).
        "wc": jnp.eye(num_node, dtype=jnp.float32)
              + 0.05 * jax.random.normal(ks[4], (num_node, num_node), jnp.float32),
        "bc": 0.1 * jax.random.normal(ks[5], (num_node,), jnp.float32),
        "wo": 0.1 * jax.random.normal(ks[6], (output_dim, f1_size), jnp.float32),
        "bo": 0.1 * jax.random.normal(ks[7], (output_dim,), jnp.float32),
        # affine params are ones/zeros in the module; perturb deterministically so
        # the (de)normalization path is exercised non-trivially.
        "aw": 1.0 + 0.05 * jax.random.normal(ks[8], (num_node,), jnp.float32),
        "ab": jnp.full((num_node,), 0.01, jnp.float32),
    }


if __name__ == "__main__":
    input_dim, hid_dim, f1_size, output_dim, num_node = 16, 32, 24, 16, 8

    key = jax.random.PRNGKey(0)
    kx, kp, kx2 = jax.random.split(key, 3)
    params = init_params(kp, input_dim, hid_dim, f1_size, output_dim, num_node)

    # ---- tight-tolerance correctness check: f32 matmul path, B=2 ----
    B = 2
    x = jax.random.normal(kx, (B, input_dim, num_node), jnp.float32)
    cfg = plan_ieblock(B, input_dim, num_node, hid_dim, f1_size, output_dim)
    prep_f32 = prepare_ieblock(params, cfg, matmul_dtype=jnp.float32)   # built once, reused
    out = jax.block_until_ready(ieblock_forward(x, prep_f32, cfg))
    ref = ieblock_reference(x, params)
    assert out.shape == (B, output_dim, num_node)
    assert jnp.allclose(out, ref, atol=1e-4, rtol=1e-4), "mismatch vs JAX reference (f32)"

    # ---- fast path: bf16 matmul operands, norm/denorm stays f32 (relaxed tol) ----
    prep_bf16 = prepare_ieblock(params, cfg, matmul_dtype=jnp.bfloat16)
    out_bf = jax.block_until_ready(ieblock_forward(x, prep_bf16, cfg))
    assert jnp.allclose(out_bf, ref, atol=3e-2, rtol=3e-2), "mismatch vs JAX reference (bf16)"

    # ---- second shape: exercises batch padding inside the lane-dense packing.
    # Same b_blk => the prepared (kron'd / tiled) params are reused, not rebuilt.
    B2 = 5
    x2 = jax.random.normal(kx2, (B2, input_dim, num_node), jnp.float32)
    cfg2 = plan_ieblock(B2, input_dim, num_node, hid_dim, f1_size, output_dim)
    assert cfg2.b_blk == cfg.b_blk
    out2 = jax.block_until_ready(ieblock_forward(x2, prep_f32, cfg2))
    ref2 = ieblock_reference(x2, params)
    assert out2.shape == (B2, output_dim, num_node)
    assert jnp.allclose(out2, ref2, atol=1e-4, rtol=1e-4), "mismatch (packed/padded)"

    print("KERNEL_OK")
</pallas_src>

<mosaic_0001>
module attributes {stable_mosaic.version = 11 : i64} {
  func.func @ieblock_kernel(%arg0: i32, %arg1: memref<1x16x128xf32, #tpu.memory_space<vmem>>, %arg2: memref<32x16xf32, #tpu.memory_space<vmem>>, %arg3: memref<32x128xf32, #tpu.memory_space<vmem>>, %arg4: memref<24x32xf32, #tpu.memory_space<vmem>>, %arg5: memref<24x128xf32, #tpu.memory_space<vmem>>, %arg6: memref<16x24xf32, #tpu.memory_space<vmem>>, %arg7: memref<128x128xf32, #tpu.memory_space<vmem>>, %arg8: memref<16x128xf32, #tpu.memory_space<vmem>>, %arg9: memref<1x128xf32, #tpu.memory_space<vmem>>, %arg10: memref<1x128xf32, #tpu.memory_space<vmem>>, %arg11: memref<1x128xf32, #tpu.memory_space<vmem>>, %arg12: memref<1x16x128xf32, #tpu.memory_space<vmem>>) attributes {dimension_semantics = [#tpu.dimension_semantics<parallel>], iteration_bounds = array<i64: 1>, scalar_prefetch = 0 : i64, scratch_operands = 0 : i64, tpu.core_type = #tpu.core_type<tc>, window_params = [{transform_indices = @transform_0, window_bounds = array<i64: 1, 16, 128>}, {pipeline_mode = #tpu.pipeline_mode<synchronous>, transform_indices = @transform_1, window_bounds = array<i64: 32, 16>}, {pipeline_mode = #tpu.pipeline_mode<synchronous>, transform_indices = @transform_2, window_bounds = array<i64: 32, 128>}, {pipeline_mode = #tpu.pipeline_mode<synchronous>, transform_indices = @transform_3, window_bounds = array<i64: 24, 32>}, {pipeline_mode = #tpu.pipeline_mode<synchronous>, transform_indices = @transform_4, window_bounds = array<i64: 24, 128>}, {pipeline_mode = #tpu.pipeline_mode<synchronous>, transform_indices = @transform_5, window_bounds = array<i64: 16, 24>}, {pipeline_mode = #tpu.pipeline_mode<synchronous>, transform_indices = @transform_6, window_bounds = array<i64: 128, 128>}, {pipeline_mode = #tpu.pipeline_mode<synchronous>, transform_indices = @transform_7, window_bounds = array<i64: 16, 128>}, {pipeline_mode = #tpu.pipeline_mode<synchronous>, transform_indices = @transform_8, window_bounds = array<i64: 1, 128>}, {pipeline_mode = #tpu.pipeline_mode<synchronous>, transform_indices = @transform_9, window_bounds = array<i64: 1, 128>}, {pipeline_mode = #tpu.pipeline_mode<synchronous>, transform_indices = @transform_10, window_bounds = array<i64: 1, 128>}, {transform_indices = @transform_11, window_bounds = array<i64: 1, 16, 128>}]} {
    %c0 = arith.constant 0 : index
    %c0_0 = arith.constant 0 : index
    %c0_1 = arith.constant 0 : index
    %0 = vector.load %arg1[%c0, %c0_0, %c0_1] : memref<1x16x128xf32, #tpu.memory_space<vmem>>, vector<1x16x128xf32>
    %1 = vector.shape_cast %0 : vector<1x16x128xf32> to vector<16x128xf32>
    %cst = arith.constant dense<0.000000e+00> : vector<128xf32>
    %2 = vector.multi_reduction <add>, %1, %cst [0] : vector<16x128xf32> to vector<128xf32>
    %3 = vector.shape_cast %2 : vector<128xf32> to vector<1x128xf32>
    %cst_2 = arith.constant 1.600000e+01 : f32
    %4 = vector.broadcast %cst_2 : f32 to vector<1x128xf32>
    %5 = arith.divf %3, %4 : vector<1x128xf32>
    %6 = vector.broadcast %5 : vector<1x128xf32> to vector<16x128xf32>
    %7 = arith.subf %1, %6 : vector<16x128xf32>
    %8 = arith.mulf %7, %7 : vector<16x128xf32>
    %cst_3 = arith.constant dense<0.000000e+00> : vector<128xf32>
    %9 = vector.multi_reduction <add>, %8, %cst_3 [0] : vector<16x128xf32> to vector<128xf32>
    %10 = vector.shape_cast %9 : vector<128xf32> to vector<1x128xf32>
    %cst_4 = arith.constant 1.600000e+01 : f32
    %11 = vector.broadcast %cst_4 : f32 to vector<1x128xf32>
    %12 = arith.divf %10, %11 : vector<1x128xf32>
    %cst_5 = arith.constant 9.99999974E-6 : f32
    %13 = vector.broadcast %cst_5 : f32 to vector<1x128xf32>
    %14 = arith.addf %12, %13 : vector<1x128xf32>
    %15 = math.rsqrt %14 : vector<1x128xf32>
    %cst_6 = arith.constant 9.99999974E-6 : f32
    %16 = vector.broadcast %cst_6 : f32 to vector<1x128xf32>
    %17 = arith.addf %12, %16 : vector<1x128xf32>
    %18 = arith.mulf %17, %15 : vector<1x128xf32>
    %c0_7 = arith.constant 0 : index
    %c0_8 = arith.constant 0 : index
    %19 = vector.load %arg9[%c0_7, %c0_8] : memref<1x128xf32, #tpu.memory_space<vmem>>, vector<1x128xf32>
    %20 = arith.mulf %15, %19 : vector<1x128xf32>
    %21 = vector.broadcast %20 : vector<1x128xf32> to vector<16x128xf32>
    %22 = arith.mulf %7, %21 : vector<16x128xf32>
    %c0_9 = arith.constant 0 : index
    %c0_10 = arith.constant 0 : index
    %23 = vector.load %arg10[%c0_9, %c0_10] : memref<1x128xf32, #tpu.memory_space<vmem>>, vector<1x128xf32>
    %24 = vector.broadcast %23 : vector<1x128xf32> to vector<16x128xf32>
    %25 = arith.addf %22, %24 : vector<16x128xf32>
    %c0_11 = arith.constant 0 : index
    %c0_12 = arith.constant 0 : index
    %26 = vector.load %arg2[%c0_11, %c0_12] : memref<32x16xf32, #tpu.memory_space<vmem>>, vector<32x16xf32>
    %cst_13 = arith.constant dense<0.000000e+00> : vector<32x128xf32>
    %27 = tpu.matmul %26, %25, %cst_13 {dimension_numbers = #tpu.dot_dimension_numbers<[1], [0], [0], [1], [0, 0, 1, 1], [], []>} : vector<32x16xf32>, vector<16x128xf32>, vector<32x128xf32> -> vector<32x128xf32>
    %c0_14 = arith.constant 0 : index
    %c0_15 = arith.constant 0 : index
    %28 = vector.load %arg3[%c0_14, %c0_15] : memref<32x128xf32, #tpu.memory_space<vmem>>, vector<32x128xf32>
    %29 = arith.addf %27, %28 : vector<32x128xf32>
    %cst_16 = arith.constant 0.00999999977 : f32
    %30 = vector.broadcast %cst_16 : f32 to vector<32x128xf32>
    %31 = arith.mulf %30, %29 : vector<32x128xf32>
    %32 = arith.maximumf %29, %31 : vector<32x128xf32>
    %c0_17 = arith.constant 0 : index
    %c0_18 = arith.constant 0 : index
    %33 = vector.load %arg4[%c0_17, %c0_18] : memref<24x32xf32, #tpu.memory_space<vmem>>, vector<24x32xf32>
    %cst_19 = arith.constant dense<0.000000e+00> : vector<24x128xf32>
    %34 = tpu.matmul %33, %32, %cst_19 {dimension_numbers = #tpu.dot_dimension_numbers<[1], [0], [0], [1], [0, 0, 1, 1], [], []>} : vector<24x32xf32>, vector<32x128xf32>, vector<24x128xf32> -> vector<24x128xf32>
    %c0_20 = arith.constant 0 : index
    %c0_21 = arith.constant 0 : index
    %35 = vector.load %arg5[%c0_20, %c0_21] : memref<24x128xf32, #tpu.memory_space<vmem>>, vector<24x128xf32>
    %36 = arith.addf %34, %35 : vector<24x128xf32>
    %c0_22 = arith.constant 0 : index
    %c0_23 = arith.constant 0 : index
    %37 = vector.load %arg6[%c0_22, %c0_23] : memref<16x24xf32, #tpu.memory_space<vmem>>, vector<16x24xf32>
    %cst_24 = arith.constant dense<0.000000e+00> : vector<16x128xf32>
    %38 = tpu.matmul %37, %36, %cst_24 {dimension_numbers = #tpu.dot_dimension_numbers<[1], [0], [0], [1], [0, 0, 1, 1], [], []>} : vector<16x24xf32>, vector<24x128xf32>, vector<16x128xf32> -> vector<16x128xf32>
    %c0_25 = arith.constant 0 : index
    %c0_26 = arith.constant 0 : index
    %39 = vector.load %arg7[%c0_25, %c0_26] : memref<128x128xf32, #tpu.memory_space<vmem>>, vector<128x128xf32>
    %cst_27 = arith.constant dense<0.000000e+00> : vector<16x128xf32>
    %40 = tpu.matmul %38, %39, %cst_27 {dimension_numbers = #tpu.dot_dimension_numbers<[1], [0], [0], [1], [0, 0, 1, 1], [], []>} : vector<16x128xf32>, vector<128x128xf32>, vector<16x128xf32> -> vector<16x128xf32>
    %c0_28 = arith.constant 0 : index
    %c0_29 = arith.constant 0 : index
    %41 = vector.load %arg8[%c0_28, %c0_29] : memref<16x128xf32, #tpu.memory_space<vmem>>, vector<16x128xf32>
    %42 = arith.addf %40, %41 : vector<16x128xf32>
    %c0_30 = arith.constant 0 : index
    %c0_31 = arith.constant 0 : index
    %43 = vector.load %arg10[%c0_30, %c0_31] : memref<1x128xf32, #tpu.memory_space<vmem>>, vector<1x128xf32>
    %44 = vector.broadcast %43 : vector<1x128xf32> to vector<16x128xf32>
    %45 = arith.subf %42, %44 : vector<16x128xf32>
    %c0_32 = arith.constant 0 : index
    %c0_33 = arith.constant 0 : index
    %46 = vector.load %arg11[%c0_32, %c0_33] : memref<1x128xf32, #tpu.memory_space<vmem>>, vector<1x128xf32>
    %47 = vector.broadcast %46 : vector<1x128xf32> to vector<16x128xf32>
    %48 = arith.mulf %45, %47 : vector<16x128xf32>
    %49 = vector.broadcast %18 : vector<1x128xf32> to vector<16x128xf32>
    %50 = arith.mulf %48, %49 : vector<16x128xf32>
    %51 = vector.broadcast %5 : vector<1x128xf32> to vector<16x128xf32>
    %52 = arith.addf %50, %51 : vector<16x128xf32>
    %c0_34 = arith.constant 0 : index
    %c0_35 = arith.constant 0 : index
    %c0_36 = arith.constant 0 : index
    %53 = vector.load %arg12[%c0_34, %c0_35, %c0_36] : memref<1x16x128xf32, #tpu.memory_space<vmem>>, vector<1x16x128xf32>
    %54 = vector.shape_cast %53 : vector<1x16x128xf32> to vector<16x128xf32>
    %55 = vector.shape_cast %52 : vector<16x128xf32> to vector<1x16x128xf32>
    tpu.vector_store %arg12[%c0_34, %c0_35, %c0_36], %55 {strides = array<i32>} : memref<1x16x128xf32, #tpu.memory_space<vmem>>, vector<1x16x128xf32>,
    return
  }
  func.func @transform_0(%arg0: i32) -> (i32, i32, i32) {
    %c0_i32 = arith.constant 0 : i32
    %c0_i32_0 = arith.constant 0 : i32
    %c0_i32_1 = arith.constant 0 : i32
    return %arg0, %c0_i32, %c0_i32_0 : i32, i32, i32
  }
  func.func @transform_1(%arg0: i32) -> (i32, i32) {
    %c0_i32 = arith.constant 0 : i32
    %c0_i32_0 = arith.constant 0 : i32
    %c0_i32_1 = arith.constant 0 : i32
    return %c0_i32, %c0_i32_0 : i32, i32
  }
  func.func @transform_2(%arg0: i32) -> (i32, i32) {
    %c0_i32 = arith.constant 0 : i32
    %c0_i32_0 = arith.constant 0 : i32
    %c0_i32_1 = arith.constant 0 : i32
    return %c0_i32, %c0_i32_0 : i32, i32
  }
  func.func @transform_3(%arg0: i32) -> (i32, i32) {
    %c0_i32 = arith.constant 0 : i32
    %c0_i32_0 = arith.constant 0 : i32
    %c0_i32_1 = arith.constant 0 : i32
    return %c0_i32, %c0_i32_0 : i32, i32
  }
  func.func @transform_4(%arg0: i32) -> (i32, i32) {
    %c0_i32 = arith.constant 0 : i32
    %c0_i32_0 = arith.constant 0 : i32
    %c0_i32_1 = arith.constant 0 : i32
    return %c0_i32, %c0_i32_0 : i32, i32
  }
  func.func @transform_5(%arg0: i32) -> (i32, i32) {
    %c0_i32 = arith.constant 0 : i32
    %c0_i32_0 = arith.constant 0 : i32
    %c0_i32_1 = arith.constant 0 : i32
    return %c0_i32, %c0_i32_0 : i32, i32
  }
  func.func @transform_6(%arg0: i32) -> (i32, i32) {
    %c0_i32 = arith.constant 0 : i32
    %c0_i32_0 = arith.constant 0 : i32
    %c0_i32_1 = arith.constant 0 : i32
    return %c0_i32, %c0_i32_0 : i32, i32
  }
  func.func @transform_7(%arg0: i32) -> (i32, i32) {
    %c0_i32 = arith.constant 0 : i32
    %c0_i32_0 = arith.constant 0 : i32
    %c0_i32_1 = arith.constant 0 : i32
    return %c0_i32, %c0_i32_0 : i32, i32
  }
  func.func @transform_8(%arg0: i32) -> (i32, i32) {
    %c0_i32 = arith.constant 0 : i32
    %c0_i32_0 = arith.constant 0 : i32
    %c0_i32_1 = arith.constant 0 : i32
    return %c0_i32, %c0_i32_0 : i32, i32
  }
  func.func @transform_9(%arg0: i32) -> (i32, i32) {
    %c0_i32 = arith.constant 0 : i32
    %c0_i32_0 = arith.constant 0 : i32
    %c0_i32_1 = arith.constant 0 : i32
    return %c0_i32, %c0_i32_0 : i32, i32
  }
  func.func @transform_10(%arg0: i32) -> (i32, i32) {
    %c0_i32 = arith.constant 0 : i32
    %c0_i32_0 = arith.constant 0 : i32
    %c0_i32_1 = arith.constant 0 : i32
    return %c0_i32, %c0_i32_0 : i32, i32
  }
  func.func @transform_11(%arg0: i32) -> (i32, i32, i32) {
    %c0_i32 = arith.constant 0 : i32
    %c0_i32_0 = arith.constant 0 : i32
    %c0_i32_1 = arith.constant 0 : i32
    return %arg0, %c0_i32, %c0_i32_0 : i32, i32, i32
  }
}

</mosaic_0001>

<llo_original>
// kernel: _ieblock_apply.1
$region0: #{_ieblock_apply.1}
  #allocation0 [shape = 'u32[]', space=smem, size = 0x4, offset = 0x4, fixed_abs, tag = 'smem constant byte address 0x4 - core index']
  #allocation1 [shape = 'u32[144,128]{1,0:T(1,128)}', space=vmem, size = 0x12000, scoped, tag = 'internal scratch']
  %s0 = inlined_call_operand.vmem [shape: f32[1,16,128], index: 0, kind: input, shape index: {}]
  %s1 = inlined_call_operand.vmem [shape: f32[32,16], index: 1, kind: input, shape index: {}]
  %s2 = inlined_call_operand.vmem [shape: f32[32,128], index: 2, kind: input, shape index: {}]
  %s3 = inlined_call_operand.vmem [shape: f32[24,32], index: 3, kind: input, shape index: {}]
  %s4 = inlined_call_operand.vmem [shape: f32[24,128], index: 4, kind: input, shape index: {}]
  %s5 = inlined_call_operand.vmem [shape: f32[16,24], index: 5, kind: input, shape index: {}]
  %s6 = inlined_call_operand.vmem [shape: f32[128,128], index: 6, kind: input, shape index: {}]
  %s7 = inlined_call_operand.vmem [shape: f32[16,128], index: 7, kind: input, shape index: {}]
  %s8 = inlined_call_operand.vmem [shape: f32[1,128], index: 8, kind: input, shape index: {}]
  %s9 = inlined_call_operand.vmem [shape: f32[1,128], index: 9, kind: input, shape index: {}]
  %s10 = inlined_call_operand.vmem [shape: f32[1,128], index: 10, kind: input, shape index: {}]
  %s11 = inlined_call_operand.vmem [shape: f32[1,16,128], index: 11, kind: output, shape index: {}]
  %s12 = sld [smem:[#allocation0]]
  $region54: #{_ieblock_apply.1} parent=0
    _
  %s14 = ssub.s32 1, %s12
  %s15 = scalar_select 0, %s14, %s12
  // Predicated region
  $region2: #{_ieblock_apply.1} parent=0 // pred_check
    _
  $region3: #{_ieblock_apply.1} parent=0 // pred_check_branch
    %17 = sbr.rel (0) target = $region5
  $region4: #{_ieblock_apply.1} parent=0 // pred_region
    _
  $region5: #{_ieblock_apply.1} parent=0 // pred_fallthru
    _
  // Predicated region
  $region6: #{_ieblock_apply.1} parent=0 // pred_check
    _
  $region7: #{_ieblock_apply.1} parent=0 // pred_check_branch
    %19 = sbr.rel (0) target = $region9
  $region8: #{_ieblock_apply.1} parent=0 // pred_region
    _
  $region9: #{_ieblock_apply.1} parent=0 // pred_fallthru
    _
  // Predicated region
  $region10: #{_ieblock_apply.1} parent=0 // pred_check
    _
  $region11: #{_ieblock_apply.1} parent=0 // pred_check_branch
    %21 = sbr.rel (0) target = $region13
  $region12: #{_ieblock_apply.1} parent=0 // pred_region
    _
  $region13: #{_ieblock_apply.1} parent=0 // pred_fallthru
    _
  // Predicated region
  $region14: #{_ieblock_apply.1} parent=0 // pred_check
    _
  $region15: #{_ieblock_apply.1} parent=0 // pred_check_branch
    %23 = sbr.rel (0) target = $region17
  $region16: #{_ieblock_apply.1} parent=0 // pred_region
    _
  $region17: #{_ieblock_apply.1} parent=0 // pred_fallthru
    _
  // Predicated region
  $region18: #{_ieblock_apply.1} parent=0 // pred_check
    _
  $region19: #{_ieblock_apply.1} parent=0 // pred_check_branch
    %25 = sbr.rel (0) target = $region21
  $region20: #{_ieblock_apply.1} parent=0 // pred_region
    _
  $region21: #{_ieblock_apply.1} parent=0 // pred_fallthru
    _
  // Predicated region
  $region22: #{_ieblock_apply.1} parent=0 // pred_check
    _
  $region23: #{_ieblock_apply.1} parent=0 // pred_check_branch
    %27 = sbr.rel (0) target = $region25
  $region24: #{_ieblock_apply.1} parent=0 // pred_region
    _
  $region25: #{_ieblock_apply.1} parent=0 // pred_fallthru
    _
  // Predicated region
  $region26: #{_ieblock_apply.1} parent=0 // pred_check
    _
  $region27: #{_ieblock_apply.1} parent=0 // pred_check_branch
    %29 = sbr.rel (0) target = $region29
  $region28: #{_ieblock_apply.1} parent=0 // pred_region
    _
  $region29: #{_ieblock_apply.1} parent=0 // pred_fallthru
    _
  // Predicated region
  $region30: #{_ieblock_apply.1} parent=0 // pred_check
    _
  $region31: #{_ieblock_apply.1} parent=0 // pred_check_branch
    %31 = sbr.rel (0) target = $region33
  $region32: #{_ieblock_apply.1} parent=0 // pred_region
    _
  $region33: #{_ieblock_apply.1} parent=0 // pred_fallthru
    _
  // Predicated region
  $region34: #{_ieblock_apply.1} parent=0 // pred_check
    _
  $region35: #{_ieblock_apply.1} parent=0 // pred_check_branch
    %33 = sbr.rel (0) target = $region37
  $region36: #{_ieblock_apply.1} parent=0 // pred_region
    _
  $region37: #{_ieblock_apply.1} parent=0 // pred_fallthru
    _
  // Predicated region
  $region38: #{_ieblock_apply.1} parent=0 // pred_check
    _
  $region39: #{_ieblock_apply.1} parent=0 // pred_check_branch
    %35 = sbr.rel (0) target = $region41
  $region40: #{_ieblock_apply.1} parent=0 // pred_region
    _
  $region41: #{_ieblock_apply.1} parent=0 // pred_fallthru
    _
  // Predicated region
  $region42: #{_ieblock_apply.1} parent=0 // pred_check
    _
  $region43: #{_ieblock_apply.1} parent=0 // pred_check_branch
    %37 = sbr.rel (0) target = $region45
  $region44: #{_ieblock_apply.1} parent=0 // pred_region
    _
  $region45: #{_ieblock_apply.1} parent=0 // pred_fallthru
    _
  %v38 = vld [vmem:[%s0] sm:$0xff]
  %v39 = vld [vmem:[%s0 + $0x8] sm:$0xff]
  %v40 = vadd.f32 %v38, %v39
  %v41 = vrot.slane %v40, 4
  %v42 = vadd.f32 %v40, %v41
  %v43 = vrot.slane %v42, 2
  %v44 = vadd.f32 %v42, %v43
  %v45 = vrot.slane %v44, 1
  %v46 = vadd.f32 %v44, %v45
  %v47 = vrcp.pop 16.0
  %v48 = vmul.f32 %v46, %v47
  %v49 = vsub.f32 %v38, %v48
  %v50 = vsub.f32 %v39, %v48
  %v51 = vmul.f32 %v49, %v49
  %v52 = vmul.f32 %v50, %v50
  %v53 = vadd.f32 %v51, %v52
  %v54 = vrot.slane %v53, 4
  %v55 = vadd.f32 %v53, %v54
  %v56 = vrot.slane %v55, 2
  %v57 = vadd.f32 %v55, %v56
  %v58 = vrot.slane %v57, 1
  %v59 = vadd.f32 %v57, %v58
  %v60 = vmul.f32 %v59, %v47
  %v61 = vadd.f32 %v60, 1e-05
  %v62 = vrsqrt.pop %v61
  %v63 = vmul.f32 %v61, %v62
  %v64 = vld [vmem:[%s8] sm:$0x1]
  %v65 = vmul.f32 %v62, %v64
  %v66 = vlaneseq
  %v67 = vshrl.u32 %v66, 7
  %v68 = vsub.s32 0, %v67
  %v69 = vrot.slane %v65, %v68
  %v70 = vmul.f32 %v49, %v69
  %v71 = vmul.f32 %v50, %v69
  %v72 = vld [vmem:[%s9] sm:$0x1]
  %v74 = vlaneseq
  %v75 = vshrl.u32 %v74, 7
  %v76 = vsub.s32 0, %v75
  %v77 = vrot.slane %v72, %v76
  %v79 = vadd.f32 %v70, %v77
  %v80 = vadd.f32 %v71, %v77
  %v81 = vld [vmem:[%s1] sm:$0xff]
  %v82 = vld [vmem:[%s1 + $0x8] sm:$0xff]
  %v83 = vld [vmem:[%s1 + $0x10] sm:$0xff]
  %v84 = vld [vmem:[%s1 + $0x18] sm:$0xff]
  %v85 = vld [vmem:[%s2] sm:$0xff]
  %v86 = vld [vmem:[%s2 + $0x8] sm:$0xff]
  %v87 = vld [vmem:[%s2 + $0x10] sm:$0xff]
  %v88 = vld [vmem:[%s2 + $0x18] sm:$0xff]
  %vm89 = vcmask 130048
  %v91 = vsel %vm89, %v81, 0
  %v94 = vsel %vm89, %v82, 0
  %v97 = vsel %vm89, %v83, 0
  %v100 = vsel %vm89, %v84, 0
  %102 = vmatprep.subr.mxu0 0.0
  %103 = vmatpush1.msra.mxu0 %v79
  %104 = vmatprep.subr.mxu0 0.0
  %105 = vmatpush1.msra.mxu0 %v80
  %106 = vmatprep.subr.mxu0 0.0
  %107 = vmatpush1.msra.mxu0 0.0
  %108 = vmatprep.subr.mxu0 0.0
  %109 = vmatpush1.msra.mxu0 0.0
  %110 = vmatprep.subr.mxu0 0.0
  %111 = vmatpush1.msra.mxu0 0.0
  %112 = vmatprep.subr.mxu0 0.0
  %113 = vmatpush1.msra.mxu0 0.0
  %114 = vmatprep.subr.mxu0 0.0
  %115 = vmatpush1.msra.mxu0 0.0
  %116 = vmatprep.subr.mxu0 0.0
  %117 = vmatpush1.msra.mxu0 0.0
  %118 = vmatprep.subr.mxu0 0.0
  %119 = vmatpush1.msra.mxu0 0.0
  %120 = vmatprep.subr.mxu0 0.0
  %121 = vmatpush1.msra.mxu0 0.0
  %122 = vmatprep.subr.mxu0 0.0
  %123 = vmatpush1.msra.mxu0 0.0
  %124 = vmatprep.subr.mxu0 0.0
  %125 = vmatpush1.msra.mxu0 0.0
  %126 = vmatprep.subr.mxu0 0.0
  %127 = vmatpush1.msra.mxu0 0.0
  %128 = vmatprep.subr.mxu0 0.0
  %129 = vmatpush1.msra.mxu0 0.0
  %130 = vmatprep.subr.mxu0 0.0
  %131 = vmatpush1.msra.mxu0 0.0
  %132 = vmatprep.subr.mxu0 0.0
  %133 = vmatpush1.msra.mxu0 0.0
  %134 = vmatprep.subr.mxu0 0.0
  %135 = vmatpush1.msra.mxu0 0.0
  %136 = vmatprep.subr.mxu0 0.0
  %137 = vmatpush1.msra.mxu0 0.0
  %138 = vmatprep.subr.mxu0 0.0
  %139 = vmatpush1.msra.mxu0 0.0
  %140 = vmatprep.subr.mxu0 0.0
  %141 = vmatpush1.msra.mxu0 0.0
  %142 = vmatprep.subr.mxu0 0.0
  %143 = vmatpush1.msra.mxu0 0.0
  %144 = vmatprep.subr.mxu0 0.0
  %145 = vmatpush1.msra.mxu0 0.0
  %146 = vmatprep.subr.mxu0 0.0
  %147 = vmatpush1.msra.mxu0 0.0
  %148 = vmatprep.subr.mxu0 0.0
  %149 = vmatpush1.msra.mxu0 0.0
  %150 = vmatprep.subr.mxu0 0.0
  %151 = vmatpush1.msra.mxu0 0.0
  %152 = vmatprep.subr.mxu0 0.0
  %153 = vmatpush1.msra.mxu0 0.0
  %154 = vmatprep.subr.mxu0 0.0
  %155 = vmatpush1.msra.mxu0 0.0
  %156 = vmatprep.subr.mxu0 0.0
  %157 = vmatpush1.msra.mxu0 0.0
  %158 = vmatprep.subr.mxu0 0.0
  %159 = vmatpush1.msra.mxu0 0.0
  %160 = vmatprep.subr.mxu0 0.0
  %161 = vmatpush1.msra.mxu0 0.0
  %162 = vmatprep.subr.mxu0 0.0
  %163 = vmatpush1.msra.mxu0 0.0
  %164 = vmatprep.subr.mxu0 0.0
  %165 = vmatpush1.msra.mxu0 0.0
  %166 = vmatprep.mubr.f32.mxu0 0.0
  %167 = vmatmul.mubr.f32.gmra.mrb[0].mxu0 %v91
  %v168 = vpop.f32.mrb[0].mxu0
  %v169 = vadd.f32 %v85, %v168
  %v170 = vpop.f32.mrb[0].mxu0
  %171 = vmatprep.mubr.f32.mxu0 0.0
  %172 = vmatmul.mubr.f32.gmra.mrb[0].mxu0 %v94
  %v173 = vpop.f32.mrb[0].mxu0
  %v174 = vadd.f32 %v86, %v173
  %v175 = vpop.f32.mrb[0].mxu0
  %176 = vmatprep.mubr.f32.mxu0 0.0
  %177 = vmatmul.mubr.f32.gmra.mrb[0].mxu0 %v97
  %v178 = vpop.f32.mrb[0].mxu0
  %v179 = vadd.f32 %v87, %v178
  %v180 = vpop.f32.mrb[0].mxu0
  %181 = vmatprep.mubr.f32.mxu0 0.0
  %182 = vmatmul.mubr.f32.gmra.mrb[0].mxu0 %v100
  %v183 = vpop.f32.mrb[0].mxu0
  %v184 = vadd.f32 %v88, %v183
  %v185 = vpop.f32.mrb[0].mxu0
  %186 = vdwg.mxu0
  %v187 = vmul.f32 %v169, 0.01
  %v188 = vmul.f32 %v174, 0.01
  %v189 = vmul.f32 %v179, 0.01
  %v190 = vmul.f32 %v184, 0.01
  %v191 = vmax.f32 %v169, %v187
  %v192 = vmax.f32 %v174, %v188
  %v193 = vmax.f32 %v179, %v189
  %v194 = vmax.f32 %v184, %v190
  %v195 = vld [vmem:[%s3] sm:$0xff]
  %v196 = vld [vmem:[%s3 + $0x8] sm:$0xff]
  %v197 = vld [vmem:[%s3 + $0x10] sm:$0xff]
  %v198 = vld [vmem:[%s4] sm:$0xff]
  %v199 = vld [vmem:[%s4 + $0x8] sm:$0xff]
  %v200 = vld [vmem:[%s4 + $0x10] sm:$0xff]
  %vm201 = vcmask 261120
  %v203 = vsel %vm201, %v195, 0
  %v206 = vsel %vm201, %v196, 0
  %v209 = vsel %vm201, %v197, 0
  %211 = vmatprep.subr.mxu0 0.0
  %212 = vmatpush1.msra.mxu0 %v191
  %213 = vmatprep.subr.mxu0 0.0
  %214 = vmatpush1.msra.mxu0 %v192
  %215 = vmatprep.subr.mxu0 0.0
  %216 = vmatpush1.msra.mxu0 %v193
  %217 = vmatprep.subr.mxu0 0.0
  %218 = vmatpush1.msra.mxu0 %v194
  %219 = vmatprep.subr.mxu0 0.0
  %220 = vmatpush1.msra.mxu0 0.0
  %221 = vmatprep.subr.mxu0 0.0
  %222 = vmatpush1.msra.mxu0 0.0
  %223 = vmatprep.subr.mxu0 0.0
  %224 = vmatpush1.msra.mxu0 0.0
  %225 = vmatprep.subr.mxu0 0.0
  %226 = vmatpush1.msra.mxu0 0.0
  %227 = vmatprep.subr.mxu0 0.0
  %228 = vmatpush1.msra.mxu0 0.0
  %229 = vmatprep.subr.mxu0 0.0
  %230 = vmatpush1.msra.mxu0 0.0
  %231 = vmatprep.subr.mxu0 0.0
  %232 = vmatpush1.msra.mxu0 0.0
  %233 = vmatprep.subr.mxu0 0.0
  %234 = vmatpush1.msra.mxu0 0.0
  %235 = vmatprep.subr.mxu0 0.0
  %236 = vmatpush1.msra.mxu0 0.0
  %237 = vmatprep.subr.mxu0 0.0
  %238 = vmatpush1.msra.mxu0 0.0
  %239 = vmatprep.subr.mxu0 0.0
  %240 = vmatpush1.msra.mxu0 0.0
  %241 = vmatprep.subr.mxu0 0.0
  %242 = vmatpush1.msra.mxu0 0.0
  %243 = vmatprep.subr.mxu0 0.0
  %244 = vmatpush1.msra.mxu0 0.0
  %245 = vmatprep.subr.mxu0 0.0
  %246 = vmatpush1.msra.mxu0 0.0
  %247 = vmatprep.subr.mxu0 0.0
  %248 = vmatpush1.msra.mxu0 0.0
  %249 = vmatprep.subr.mxu0 0.0
  %250 = vmatpush1.msra.mxu0 0.0
  %251 = vmatprep.subr.mxu0 0.0
  %252 = vmatpush1.msra.mxu0 0.0
  %253 = vmatprep.subr.mxu0 0.0
  %254 = vmatpush1.msra.mxu0 0.0
  %255 = vmatprep.subr.mxu0 0.0
  %256 = vmatpush1.msra.mxu0 0.0
  %257 = vmatprep.subr.mxu0 0.0
  %258 = vmatpush1.msra.mxu0 0.0
  %259 = vmatprep.subr.mxu0 0.0
  %260 = vmatpush1.msra.mxu0 0.0
  %261 = vmatprep.subr.mxu0 0.0
  %262 = vmatpush1.msra.mxu0 0.0
  %263 = vmatprep.subr.mxu0 0.0
  %264 = vmatpush1.msra.mxu0 0.0
  %265 = vmatprep.subr.mxu0 0.0
  %266 = vmatpush1.msra.mxu0 0.0
  %267 = vmatprep.subr.mxu0 0.0
  %268 = vmatpush1.msra.mxu0 0.0
  %269 = vmatprep.subr.mxu0 0.0
  %270 = vmatpush1.msra.mxu0 0.0
  %271 = vmatprep.subr.mxu0 0.0
  %272 = vmatpush1.msra.mxu0 0.0
  %273 = vmatprep.subr.mxu0 0.0
  %274 = vmatpush1.msra.mxu0 0.0
  %275 = vmatprep.mubr.f32.mxu0 0.0
  %276 = vmatmul.mubr.f32.gmra.mrb[0].mxu0 %v203
  %v277 = vpop.f32.mrb[0].mxu0
  %v278 = vadd.f32 %v198, %v277
  %v279 = vpop.f32.mrb[0].mxu0
  %280 = vmatprep.mubr.f32.mxu0 0.0
  %281 = vmatmul.mubr.f32.gmra.mrb[0].mxu0 %v206
  %v282 = vpop.f32.mrb[0].mxu0
  %v283 = vadd.f32 %v199, %v282
  %v284 = vpop.f32.mrb[0].mxu0
  %285 = vmatprep.mubr.f32.mxu0 0.0
  %286 = vmatmul.mubr.f32.gmra.mrb[0].mxu0 %v209
  %v287 = vpop.f32.mrb[0].mxu0
  %v288 = vadd.f32 %v200, %v287
  %v289 = vpop.f32.mrb[0].mxu0
  %290 = vdwg.mxu0
  %v291 = vld [vmem:[%s5] sm:$0xff]
  %v292 = vld [vmem:[%s5 + $0x8] sm:$0xff]
  %vm293 = vcmask 195584
  %v295 = vsel %vm293, %v291, 0
  %v298 = vsel %vm293, %v292, 0
  %300 = vmatprep.subr.mxu0 0.0
  %301 = vmatpush1.msra.mxu0 %v278
  %302 = vmatprep.subr.mxu0 0.0
  %303 = vmatpush1.msra.mxu0 %v283
  %304 = vmatprep.subr.mxu0 0.0
  %305 = vmatpush1.msra.mxu0 %v288
  %306 = vmatprep.subr.mxu0 0.0
  %307 = vmatpush1.msra.mxu0 0.0
  %308 = vmatprep.subr.mxu0 0.0
  %309 = vmatpush1.msra.mxu0 0.0
  %310 = vmatprep.subr.mxu0 0.0
  %311 = vmatpush1.msra.mxu0 0.0
  %312 = vmatprep.subr.mxu0 0.0
  %313 = vmatpush1.msra.mxu0 0.0
  %314 = vmatprep.subr.mxu0 0.0
  %315 = vmatpush1.msra.mxu0 0.0
  %316 = vmatprep.subr.mxu0 0.0
  %317 = vmatpush1.msra.mxu0 0.0
  %318 = vmatprep.subr.mxu0 0.0
  %319 = vmatpush1.msra.mxu0 0.0
  %320 = vmatprep.subr.mxu0 0.0
  %321 = vmatpush1.msra.mxu0 0.0
  %322 = vmatprep.subr.mxu0 0.0
  %323 = vmatpush1.msra.mxu0 0.0
  %324 = vmatprep.subr.mxu0 0.0
  %325 = vmatpush1.msra.mxu0 0.0
  %326 = vmatprep.subr.mxu0 0.0
  %327 = vmatpush1.msra.mxu0 0.0
  %328 = vmatprep.subr.mxu0 0.0
  %329 = vmatpush1.msra.mxu0 0.0
  %330 = vmatprep.subr.mxu0 0.0
  %331 = vmatpush1.msra.mxu0 0.0
  %332 = vmatprep.subr.mxu0 0.0
  %333 = vmatpush1.msra.mxu0 0.0
  %334 = vmatprep.subr.mxu0 0.0
  %335 = vmatpush1.msra.mxu0 0.0
  %336 = vmatprep.subr.mxu0 0.0
  %337 = vmatpush1.msra.mxu0 0.0
  %338 = vmatprep.subr.mxu0 0.0
  %339 = vmatpush1.msra.mxu0 0.0
  %340 = vmatprep.subr.mxu0 0.0
  %341 = vmatpush1.msra.mxu0 0.0
  %342 = vmatprep.subr.mxu0 0.0
  %343 = vmatpush1.msra.mxu0 0.0
  %344 = vmatprep.subr.mxu0 0.0
  %345 = vmatpush1.msra.mxu0 0.0
  %346 = vmatprep.subr.mxu0 0.0
  %347 = vmatpush1.msra.mxu0 0.0
  %348 = vmatprep.subr.mxu0 0.0
  %349 = vmatpush1.msra.mxu0 0.0
  %350 = vmatprep.subr.mxu0 0.0
  %351 = vmatpush1.msra.mxu0 0.0
  %352 = vmatprep.subr.mxu0 0.0
  %353 = vmatpush1.msra.mxu0 0.0
  %354 = vmatprep.subr.mxu0 0.0
  %355 = vmatpush1.msra.mxu0 0.0
  %356 = vmatprep.subr.mxu0 0.0
  %357 = vmatpush1.msra.mxu0 0.0
  %358 = vmatprep.subr.mxu0 0.0
  %359 = vmatpush1.msra.mxu0 0.0
  %360 = vmatprep.subr.mxu0 0.0
  %361 = vmatpush1.msra.mxu0 0.0
  %362 = vmatprep.subr.mxu0 0.0
  %363 = vmatpush1.msra.mxu0 0.0
  %364 = vmatprep.mubr.f32.mxu0 0.0
  %365 = vmatmul.mubr.f32.gmra.mrb[0].mxu0 %v295
  %v366 = vpop.f32.mrb[0].mxu0
  %v367 = vadd.f32 0.0, %v366
  %v368 = vpop.f32.mrb[0].mxu0
  %369 = vmatprep.mubr.f32.mxu0 0.0
  %370 = vmatmul.mubr.f32.gmra.mrb[0].mxu0 %v298
  %v371 = vpop.f32.mrb[0].mxu0
  %v372 = vadd.f32 0.0, %v371
  %v373 = vpop.f32.mrb[0].mxu0
  %374 = vdwg.mxu0
  %v375 = vld [vmem:[%s6] sm:$0xff]
  %v376 = vld [vmem:[%s6 + $0x8] sm:$0xff]
  %v377 = vld [vmem:[%s6 + $0x10] sm:$0xff]
  %v378 = vld [vmem:[%s6 + $0x18] sm:$0xff]
  %v379 = vld [vmem:[%s6 + $0x20] sm:$0xff]
  %v380 = vld [vmem:[%s6 + $0x28] sm:$0xff]
  %v381 = vld [vmem:[%s6 + $0x30] sm:$0xff]
  %v382 = vld [vmem:[%s6 + $0x38] sm:$0xff]
  %v383 = vld [vmem:[%s6 + $0x40] sm:$0xff]
  %v384 = vld [vmem:[%s6 + $0x48] sm:$0xff]
  %v385 = vld [vmem:[%s6 + $0x50] sm:$0xff]
  %v386 = vld [vmem:[%s6 + $0x58] sm:$0xff]
  %v387 = vld [vmem:[%s6 + $0x60] sm:$0xff]
  %v388 = vld [vmem:[%s6 + $0x68] sm:$0xff]
  %v389 = vld [vmem:[%s6 + $0x70] sm:$0xff]
  %v390 = vld [vmem:[%s6 + $0x78] sm:$0xff]
  %v391 = vld [vmem:[%s7] sm:$0xff]
  %v392 = vld [vmem:[%s7 + $0x8] sm:$0xff]
  %393 = vmatprep.subr.mxu0 0.0
  %394 = vmatpush1.msra.mxu0 %v375
  %395 = vmatprep.subr.mxu0 0.0
  %396 = vmatpush1.msra.mxu0 %v376
  %397 = vmatprep.subr.mxu0 0.0
  %398 = vmatpush1.msra.mxu0 %v377
  %399 = vmatprep.subr.mxu0 0.0
  %400 = vmatpush1.msra.mxu0 %v378
  %401 = vmatprep.subr.mxu0 0.0
  %402 = vmatpush1.msra.mxu0 %v379
  %403 = vmatprep.subr.mxu0 0.0
  %404 = vmatpush1.msra.mxu0 %v380
  %405 = vmatprep.subr.mxu0 0.0
  %406 = vmatpush1.msra.mxu0 %v381
  %407 = vmatprep.subr.mxu0 0.0
  %408 = vmatpush1.msra.mxu0 %v382
  %409 = vmatprep.subr.mxu0 0.0
  %410 = vmatpush1.msra.mxu0 %v383
  %411 = vmatprep.subr.mxu0 0.0
  %412 = vmatpush1.msra.mxu0 %v384
  %413 = vmatprep.subr.mxu0 0.0
  %414 = vmatpush1.msra.mxu0 %v385
  %415 = vmatprep.subr.mxu0 0.0
  %416 = vmatpush1.msra.mxu0 %v386
  %417 = vmatprep.subr.mxu0 0.0
  %418 = vmatpush1.msra.mxu0 %v387
  %419 = vmatprep.subr.mxu0 0.0
  %420 = vmatpush1.msra.mxu0 %v388
  %421 = vmatprep.subr.mxu0 0.0
  %422 = vmatpush1.msra.mxu0 %v389
  %423 = vmatprep.subr.mxu0 0.0
  %424 = vmatpush1.msra.mxu0 %v390
  %425 = vmatprep.subr.mxu0 0.0
  %426 = vmatpush1.msra.mxu0 0.0
  %427 = vmatprep.subr.mxu0 0.0
  %428 = vmatpush1.msra.mxu0 0.0
  %429 = vmatprep.subr.mxu0 0.0
  %430 = vmatpush1.msra.mxu0 0.0
  %431 = vmatprep.subr.mxu0 0.0
  %432 = vmatpush1.msra.mxu0 0.0
  %433 = vmatprep.subr.mxu0 0.0
  %434 = vmatpush1.msra.mxu0 0.0
  %435 = vmatprep.subr.mxu0 0.0
  %436 = vmatpush1.msra.mxu0 0.0
  %437 = vmatprep.subr.mxu0 0.0
  %438 = vmatpush1.msra.mxu0 0.0
  %439 = vmatprep.subr.mxu0 0.0
  %440 = vmatpush1.msra.mxu0 0.0
  %441 = vmatprep.subr.mxu0 0.0
  %442 = vmatpush1.msra.mxu0 0.0
  %443 = vmatprep.subr.mxu0 0.0
  %444 = vmatpush1.msra.mxu0 0.0
  %445 = vmatprep.subr.mxu0 0.0
  %446 = vmatpush1.msra.mxu0 0.0
  %447 = vmatprep.subr.mxu0 0.0
  %448 = vmatpush1.msra.mxu0 0.0
  %449 = vmatprep.subr.mxu0 0.0
  %450 = vmatpush1.msra.mxu0 0.0
  %451 = vmatprep.subr.mxu0 0.0
  %452 = vmatpush1.msra.mxu0 0.0
  %453 = vmatprep.subr.mxu0 0.0
  %454 = vmatpush1.msra.mxu0 0.0
  %455 = vmatprep.subr.mxu0 0.0
  %456 = vmatpush1.msra.mxu0 0.0
  %457 = vmatprep.mubr.f32.mxu0 0.0
  %458 = vmatmul.mubr.f32.gmra.mrb[0].mxu0 %v367
  %v459 = vpop.f32.mrb[0].mxu0
  %v460 = vadd.f32 %v391, %v459
  %v461 = vpop.f32.mrb[0].mxu0
  %462 = vmatprep.mubr.f32.mxu0 0.0
  %463 = vmatmul.mubr.f32.gmra.mrb[0].mxu0 %v372
  %v464 = vpop.f32.mrb[0].mxu0
  %v465 = vadd.f32 %v392, %v464
  %v466 = vpop.f32.mrb[0].mxu0
  %467 = vdwg.mxu0
  %v468 = vsub.f32 %v460, %v77
  %v469 = vsub.f32 %v465, %v77
  %v470 = vld [vmem:[%s10] sm:$0x1]
  %v472 = vlaneseq
  %v473 = vshrl.u32 %v472, 7
  %v474 = vsub.s32 0, %v473
  %v475 = vrot.slane %v470, %v474
  %v477 = vmul.f32 %v468, %v475
  %v478 = vmul.f32 %v469, %v475
  %v479 = vmul.f32 %v477, %v63
  %v480 = vmul.f32 %v478, %v63
  %v481 = vadd.f32 %v479, %v48
  %v482 = vadd.f32 %v480, %v48
  %483 = vst [vmem:[%s11] sm:$0xff] %v481
  %484 = vst [vmem:[%s11 + $0x8] sm:$0xff] %v482
  // Predicated region
  $region46: #{_ieblock_apply.1} parent=0 // pred_check
    _
  $region47: #{_ieblock_apply.1} parent=0 // pred_check_branch
    %486 = sbr.rel (0) target = $region49
  $region48: #{_ieblock_apply.1} parent=0 // pred_region
    _
  $region49: #{_ieblock_apply.1} parent=0 // pred_fallthru
    _
  // Predicated region
  $region50: #{_ieblock_apply.1} parent=0 // pred_check
    _
  $region51: #{_ieblock_apply.1} parent=0 // pred_check_branch
    %488 = sbr.rel (0) target = $region53
  $region52: #{_ieblock_apply.1} parent=0 // pred_region
    _
  $region53: #{_ieblock_apply.1} parent=0 // pred_fallthru
    _

</llo_original>
